<compile_context>
chip_gen: v5e
topology: v5e:2x2
jax: 0.10.0
libtpu: 0.0.40
codegen_flags: <defaults>
</compile_context>

<pallas_src>
import jax
import jax.numpy as jnp
from jax.experimental import pallas as pl
from jax.experimental.pallas import tpu as pltpu


# ---------------------------------------------------------------------------
# helpers
# ---------------------------------------------------------------------------
def _round_up(n, m):
    return ((n + m - 1) // m) * m


def _sublane_pack(dtype):
    return {4: 8, 2: 16, 1: 32}[jnp.dtype(dtype).itemsize]


def _pick_row_tile(M, tm, pack):
    """Row tile: big enough to fill the MXU, small enough to bound pad waste."""
    m_aligned = _round_up(M, pack)
    if m_aligned <= tm:
        return m_aligned                       # one (or few) right-sized tiles
    best, best_pad = tm, _round_up(M, tm)
    cand = tm - 128
    while cand >= 128:
        pad = _round_up(M, cand)
        if pad < best_pad:                     # less padding waste wins
            best, best_pad = cand, pad
        cand -= 128
    return best


def _vmem_limit_bytes():
    """Physical per-core VMEM minus ~16 MiB headroom (v5e/v6e ~112 MiB, v7x ~48 MiB)."""
    try:
        cap = pltpu.get_tpu_info().vmem_capacity_bytes
    except Exception:
        return 48 * 1024 * 1024                # conservative: fits v7x's 64 MiB
    return max(32 * 1024 * 1024, cap - 16 * 1024 * 1024)


# ---------------------------------------------------------------------------
# kernel
# ---------------------------------------------------------------------------
def ffn_kernel(x_ref, wg_ref, bg_ref, wv_ref, bv_ref, w2_ref, b2_ref,
               o_ref, acc_ref):
    # grid = (row tiles, F tiles); F is the (last, "arbitrary") reduction axis.
    f = pl.program_id(1)
    nf = pl.num_programs(1)

    @pl.when(f == 0)
    def _():
        acc_ref[...] = jnp.zeros_like(acc_ref)

    # In-kernel compute-dtype cast (free on the VPU under the MXU).
    x = x_ref[...].astype(wg_ref.dtype)

    # Gate / value matmuls for this F tile; f32 accumulation, f32 bias add.
    a = jnp.dot(x, wg_ref[...], preferred_element_type=jnp.float32) + bg_ref[...]
    b = jnp.dot(x, wv_ref[...], preferred_element_type=jnp.float32) + bv_ref[...]

    # SwiGLU in f32 (VPU mul/select + EUP sigmoid).
    g = (a * jax.nn.sigmoid(a)) * b

    # Down-projection tile, accumulated into the resident (tm, E) f32 scratch.
    acc_ref[...] += jnp.dot(g.astype(w2_ref.dtype), w2_ref[...],
                            preferred_element_type=jnp.float32)

    @pl.when(f == nf - 1)
    def _():
        # dropout: eval mode -> identity.
        o_ref[...] = (acc_ref[...] + b2_ref[...]).astype(o_ref.dtype)


# ---------------------------------------------------------------------------
# parameter prep (one-time; do NOT call per forward step)
# ---------------------------------------------------------------------------
def prepare_ffn_params(w1, b1, w2, b2, *, compute_dtype=None, tf=512):
    """w1:(2F,E), b1:(2F,) [rows 0:F gate, F:2F value], w2:(E,F), b2:(E,).

    Returns (wg_t (E,Fp), bg (1,Fp), wv_t (E,Fp), bv (1,Fp), w2_t (Fp,E),
    b2 (1,E)) with F zero-padded to a multiple of the streaming tile `tf`
    when F > tf.  Padded F columns are exactly zero after SwiGLU, so results
    are unchanged.
    """
    two_f, E = w1.shape
    F = two_f // 2
    cd = jnp.float32 if compute_dtype is None else compute_dtype

    wg_t = jnp.transpose(w1[:F]).astype(cd)      # (E, F)  gate
    wv_t = jnp.transpose(w1[F:]).astype(cd)      # (E, F)  value
    w2_t = jnp.transpose(w2).astype(cd)          # (F, E)
    bg = b1[:F].reshape(1, F).astype(jnp.float32)
    bv = b1[F:].reshape(1, F).astype(jnp.float32)
    b2r = b2.reshape(1, E).astype(jnp.float32)

    if F > tf:
        assert tf % 128 == 0, "streaming tile tf must be a multiple of 128"
        F_pad = _round_up(F, tf)
    else:
        F_pad = F
    if F_pad != F:
        pad = F_pad - F
        wg_t = jnp.pad(wg_t, ((0, 0), (0, pad)))
        wv_t = jnp.pad(wv_t, ((0, 0), (0, pad)))
        bg = jnp.pad(bg, ((0, 0), (0, pad)))
        bv = jnp.pad(bv, ((0, 0), (0, pad)))
        w2_t = jnp.pad(w2_t, ((0, pad), (0, 0)))
    return wg_t, bg, wv_t, bv, w2_t, b2r


# ---------------------------------------------------------------------------
# forward wrapper
# ---------------------------------------------------------------------------
def feed_forward(x, wg_t, bg, wv_t, bv, w2_t, b2r, *, tm=256, tf=512):
    """x: (B, S, E). Params from prepare_ffn_params(..., tf=<same tf>)."""
    B, S, E = x.shape
    F_pad = wg_t.shape[1]
    M = B * S
    out_dtype = x.dtype
    compute_dtype = wg_t.dtype

    # Row tiling (pad M only when needed; x keeps its native dtype).
    pack = _sublane_pack(compute_dtype)
    tm_eff = _pick_row_tile(M, tm, pack)
    M_pad = _round_up(M, tm_eff)
    x2d = x.reshape(M, E)
    if M_pad != M:
        x2d = jnp.pad(x2d, ((0, M_pad - M), (0, 0)))

    # F streaming tile.
    if F_pad <= tf:
        tf_eff = F_pad
    else:
        assert F_pad % tf == 0, "params were prepared with a different tf"
        tf_eff = tf
    nf = F_pad // tf_eff
    nm = M_pad // tm_eff
    resident = (nf == 1)     # weights fully resident -> single-buffer them

    def wspec(block_shape, index_map, single_buffer):
        if single_buffer:
            return pl.BlockSpec(block_shape, index_map,
                                pipeline_mode=pl.Buffered(1))
        return pl.BlockSpec(block_shape, index_map)

    itemsize = jnp.dtype(compute_dtype).itemsize
    weight_reads = 1 if resident else nm
    cost = pl.CostEstimate(
        flops=6 * M_pad * E * F_pad + 4 * M_pad * F_pad,
        transcendentals=M_pad * F_pad,
        bytes_accessed=(M_pad * E * jnp.dtype(x.dtype).itemsize
                        + M_pad * E * jnp.dtype(out_dtype).itemsize
                        + weight_reads * 3 * E * F_pad * itemsize
                        + (2 * F_pad + E) * 4),
    )

    out2d = pl.pallas_call(
        ffn_kernel,
        out_shape=jax.ShapeDtypeStruct((M_pad, E), out_dtype),
        grid_spec=pltpu.PrefetchScalarGridSpec(
            num_scalar_prefetch=0,
            grid=(nm, nf),
            in_specs=[
                pl.BlockSpec((tm_eff, E), lambda i, f: (i, 0)),          # x rows
                wspec((E, tf_eff), lambda i, f: (0, f), resident),       # W gate
                wspec((1, tf_eff), lambda i, f: (0, f), resident),       # b gate
                wspec((E, tf_eff), lambda i, f: (0, f), resident),       # W value
                wspec((1, tf_eff), lambda i, f: (0, f), resident),       # b value
                wspec((tf_eff, E), lambda i, f: (f, 0), resident),       # W down
                wspec((1, E), lambda i, f: (0, 0), True),                # b down
            ],
            out_specs=pl.BlockSpec((tm_eff, E), lambda i, f: (i, 0)),
            scratch_shapes=[pltpu.VMEM((tm_eff, E), jnp.float32)],       # f32 acc
        ),
        compiler_params=pltpu.CompilerParams(
            dimension_semantics=("parallel", "arbitrary"),
            vmem_limit_bytes=_vmem_limit_bytes(),
        ),
        cost_estimate=cost,
    )(x2d, wg_t, bg, wv_t, bv, w2_t, b2r)

    if M_pad != M:
        out2d = out2d[:M]
    return out2d.reshape(B, S, E)


# ---------------------------------------------------------------------------
# reference / test harness
# ---------------------------------------------------------------------------
def _init_linear(key, out_dim, in_dim, dtype=jnp.float32):
    """PyTorch-style nn.Linear init: U(-1/sqrt(in), 1/sqrt(in))."""
    kw, kb = jax.random.split(key)
    bound = 1.0 / (in_dim ** 0.5)
    w = jax.random.uniform(kw, (out_dim, in_dim), dtype, -bound, bound)
    b = jax.random.uniform(kb, (out_dim,), dtype, -bound, bound)
    return w, b


def _reference(x, w1, b1, w2, b2):
    h = jnp.einsum("bse,fe->bsf", x, w1) + b1
    F = h.shape[-1] // 2
    a, b = h[..., :F], h[..., F:]
    g = (a * jax.nn.sigmoid(a)) * b
    return jnp.einsum("bsf,ef->bse", g, w2) + b2


def _run_case(B, S, E, FFN, *, tm, tf, compute_dtype, atol):
    key = jax.random.PRNGKey(0)
    kx, k1, k2 = jax.random.split(key, 3)
    x = jax.random.normal(kx, (B, S, E), jnp.float32)
    w1, b1 = _init_linear(k1, 2 * FFN, E)       # linear1: E -> 2*FFN
    w2, b2 = _init_linear(k2, E, FFN)           # linear2: FFN -> E
    ref = _reference(x, w1, b1, w2, b2)

    params = prepare_ffn_params(w1, b1, w2, b2, compute_dtype=compute_dtype, tf=tf)
    out = jax.block_until_ready(feed_forward(x, *params, tm=tm, tf=tf))
    assert out.shape == (B, S, E)
    err = float(jnp.max(jnp.abs(out - ref)))
    assert jnp.allclose(out, ref, atol=atol, rtol=atol), f"max abs err {err}"


if __name__ == "__main__":
    # 1) Resident-weight regime (single F step, Buffered(1) weights), f32 MXU.
    _run_case(2, 8, 32, 64, tm=256, tf=512, compute_dtype=None, atol=1e-4)
    # 2) F-streamed accumulator path (nf=2) + odd row count (M padding), f32.
    _run_case(2, 7, 32, 256, tm=256, tf=128, compute_dtype=None, atol=1e-4)
    # 3) bf16 MXU operands with f32 accumulation / f32 SwiGLU, resident weights.
    _run_case(2, 8, 32, 64, tm=256, tf=512, compute_dtype=jnp.bfloat16, atol=5e-2)
    print("KERNEL_OK")
</pallas_src>

<mosaic_0001>
module attributes {stable_mosaic.version = 11 : i64} {
  func.func @ffn_kernel(%arg0: i32, %arg1: i32, %arg2: memref<16x32xf32, #tpu.memory_space<vmem>>, %arg3: memref<32x64xf32, #tpu.memory_space<vmem>>, %arg4: memref<1x64xf32, #tpu.memory_space<vmem>>, %arg5: memref<32x64xf32, #tpu.memory_space<vmem>>, %arg6: memref<1x64xf32, #tpu.memory_space<vmem>>, %arg7: memref<64x32xf32, #tpu.memory_space<vmem>>, %arg8: memref<1x32xf32, #tpu.memory_space<vmem>>, %arg9: memref<16x32xf32, #tpu.memory_space<vmem>>, %arg10: memref<16x32xf32, #tpu.memory_space<vmem>>) attributes {dimension_semantics = [#tpu.dimension_semantics<parallel>, #tpu.dimension_semantics<arbitrary>], iteration_bounds = array<i64: 1, 1>, scalar_prefetch = 0 : i64, scratch_operands = 1 : i64, tpu.core_type = #tpu.core_type<tc>, window_params = [{transform_indices = @transform_0, window_bounds = array<i64: 16, 32>}, {pipeline_mode = #tpu.pipeline_mode<synchronous>, transform_indices = @transform_1, window_bounds = array<i64: 32, 64>}, {pipeline_mode = #tpu.pipeline_mode<synchronous>, transform_indices = @transform_2, window_bounds = array<i64: 1, 64>}, {pipeline_mode = #tpu.pipeline_mode<synchronous>, transform_indices = @transform_3, window_bounds = array<i64: 32, 64>}, {pipeline_mode = #tpu.pipeline_mode<synchronous>, transform_indices = @transform_4, window_bounds = array<i64: 1, 64>}, {pipeline_mode = #tpu.pipeline_mode<synchronous>, transform_indices = @transform_5, window_bounds = array<i64: 64, 32>}, {pipeline_mode = #tpu.pipeline_mode<synchronous>, transform_indices = @transform_6, window_bounds = array<i64: 1, 32>}, {transform_indices = @transform_7, window_bounds = array<i64: 16, 32>}]} {
    %c0_i32 = arith.constant 0 : i32
    %0 = arith.cmpi eq, %arg1, %c0_i32 : i32
    %1 = arith.extui %0 : i1 to i32
    %c0_i32_0 = arith.constant 0 : i32
    %2 = arith.cmpi ne, %1, %c0_i32_0 : i32
    scf.if %2 {
      %cst_21 = arith.constant 0.000000e+00 : f32
      %29 = vector.broadcast %cst_21 : f32 to vector<16x32xf32>
      %c0_22 = arith.constant 0 : index
      %c0_23 = arith.constant 0 : index
      %30 = vector.load %arg10[%c0_22, %c0_23] : memref<16x32xf32, #tpu.memory_space<vmem>>, vector<16x32xf32>
      tpu.vector_store %arg10[%c0_22, %c0_23], %29 {strides = array<i32>} : memref<16x32xf32, #tpu.memory_space<vmem>>, vector<16x32xf32>,
    } else {
    }
    %c0 = arith.constant 0 : index
    %c0_1 = arith.constant 0 : index
    %3 = vector.load %arg2[%c0, %c0_1] : memref<16x32xf32, #tpu.memory_space<vmem>>, vector<16x32xf32>
    %c0_2 = arith.constant 0 : index
    %c0_3 = arith.constant 0 : index
    %4 = vector.load %arg3[%c0_2, %c0_3] : memref<32x64xf32, #tpu.memory_space<vmem>>, vector<32x64xf32>
    %cst = arith.constant dense<0.000000e+00> : vector<16x64xf32>
    %5 = tpu.matmul %3, %4, %cst {dimension_numbers = #tpu.dot_dimension_numbers<[1], [0], [0], [1], [0, 0, 1, 1], [], []>} : vector<16x32xf32>, vector<32x64xf32>, vector<16x64xf32> -> vector<16x64xf32>
    %c0_4 = arith.constant 0 : index
    %c0_5 = arith.constant 0 : index
    %6 = vector.load %arg4[%c0_4, %c0_5] : memref<1x64xf32, #tpu.memory_space<vmem>>, vector<1x64xf32>
    %7 = vector.broadcast %6 : vector<1x64xf32> to vector<16x64xf32>
    %8 = arith.addf %5, %7 : vector<16x64xf32>
    %c0_6 = arith.constant 0 : index
    %c0_7 = arith.constant 0 : index
    %9 = vector.load %arg5[%c0_6, %c0_7] : memref<32x64xf32, #tpu.memory_space<vmem>>, vector<32x64xf32>
    %cst_8 = arith.constant dense<0.000000e+00> : vector<16x64xf32>
    %10 = tpu.matmul %3, %9, %cst_8 {dimension_numbers = #tpu.dot_dimension_numbers<[1], [0], [0], [1], [0, 0, 1, 1], [], []>} : vector<16x32xf32>, vector<32x64xf32>, vector<16x64xf32> -> vector<16x64xf32>
    %c0_9 = arith.constant 0 : index
    %c0_10 = arith.constant 0 : index
    %11 = vector.load %arg6[%c0_9, %c0_10] : memref<1x64xf32, #tpu.memory_space<vmem>>, vector<1x64xf32>
    %12 = vector.broadcast %11 : vector<1x64xf32> to vector<16x64xf32>
    %13 = arith.addf %10, %12 : vector<16x64xf32>
    %14 = arith.negf %8 : vector<16x64xf32>
    %15 = math.exp %14 : vector<16x64xf32>
    %cst_11 = arith.constant 1.000000e+00 : f32
    %16 = vector.broadcast %cst_11 : f32 to vector<16x64xf32>
    %17 = arith.addf %16, %15 : vector<16x64xf32>
    %18 = arith.divf %16, %17 : vector<16x64xf32>
    %19 = arith.mulf %8, %18 : vector<16x64xf32>
    %20 = arith.mulf %19, %13 : vector<16x64xf32>
    %c0_12 = arith.constant 0 : index
    %c0_13 = arith.constant 0 : index
    %21 = vector.load %arg10[%c0_12, %c0_13] : memref<16x32xf32, #tpu.memory_space<vmem>>, vector<16x32xf32>
    %c0_14 = arith.constant 0 : index
    %c0_15 = arith.constant 0 : index
    %22 = vector.load %arg7[%c0_14, %c0_15] : memref<64x32xf32, #tpu.memory_space<vmem>>, vector<64x32xf32>
    %cst_16 = arith.constant dense<0.000000e+00> : vector<16x32xf32>
    %23 = tpu.matmul %20, %22, %cst_16 {dimension_numbers = #tpu.dot_dimension_numbers<[1], [0], [0], [1], [0, 0, 1, 1], [], []>} : vector<16x64xf32>, vector<64x32xf32>, vector<16x32xf32> -> vector<16x32xf32>
    %24 = arith.addf %21, %23 : vector<16x32xf32>
    %c0_17 = arith.constant 0 : index
    %c0_18 = arith.constant 0 : index
    %25 = vector.load %arg10[%c0_17, %c0_18] : memref<16x32xf32, #tpu.memory_space<vmem>>, vector<16x32xf32>
    tpu.vector_store %arg10[%c0_17, %c0_18], %24 {strides = array<i32>} : memref<16x32xf32, #tpu.memory_space<vmem>>, vector<16x32xf32>,
    %c0_i32_19 = arith.constant 0 : i32
    %26 = arith.cmpi eq, %arg1, %c0_i32_19 : i32
    %27 = arith.extui %26 : i1 to i32
    %c0_i32_20 = arith.constant 0 : i32
    %28 = arith.cmpi ne, %27, %c0_i32_20 : i32
    scf.if %28 {
      %c0_21 = arith.constant 0 : index
      %c0_22 = arith.constant 0 : index
      %29 = vector.load %arg10[%c0_21, %c0_22] : memref<16x32xf32, #tpu.memory_space<vmem>>, vector<16x32xf32>
      %c0_23 = arith.constant 0 : index
      %c0_24 = arith.constant 0 : index
      %30 = vector.load %arg8[%c0_23, %c0_24] : memref<1x32xf32, #tpu.memory_space<vmem>>, vector<1x32xf32>
      %31 = vector.broadcast %30 : vector<1x32xf32> to vector<16x32xf32>
      %32 = arith.addf %29, %31 : vector<16x32xf32>
      %c0_25 = arith.constant 0 : index
      %c0_26 = arith.constant 0 : index
      %33 = vector.load %arg9[%c0_25, %c0_26] : memref<16x32xf32, #tpu.memory_space<vmem>>, vector<16x32xf32>
      tpu.vector_store %arg9[%c0_25, %c0_26], %32 {strides = array<i32>} : memref<16x32xf32, #tpu.memory_space<vmem>>, vector<16x32xf32>,
    } else {
    }
    return
  }
  func.func @transform_0(%arg0: i32, %arg1: i32) -> (i32, i32) {
    %c0_i32 = arith.constant 0 : i32
    %c0_i32_0 = arith.constant 0 : i32
    return %arg0, %c0_i32 : i32, i32
  }
  func.func @transform_1(%arg0: i32, %arg1: i32) -> (i32, i32) {
    %c0_i32 = arith.constant 0 : i32
    %c0_i32_0 = arith.constant 0 : i32
    return %c0_i32, %arg1 : i32, i32
  }
  func.func @transform_2(%arg0: i32, %arg1: i32) -> (i32, i32) {
    %c0_i32 = arith.constant 0 : i32
    %c0_i32_0 = arith.constant 0 : i32
    return %c0_i32, %arg1 : i32, i32
  }
  func.func @transform_3(%arg0: i32, %arg1: i32) -> (i32, i32) {
    %c0_i32 = arith.constant 0 : i32
    %c0_i32_0 = arith.constant 0 : i32
    return %c0_i32, %arg1 : i32, i32
  }
  func.func @transform_4(%arg0: i32, %arg1: i32) -> (i32, i32) {
    %c0_i32 = arith.constant 0 : i32
    %c0_i32_0 = arith.constant 0 : i32
    return %c0_i32, %arg1 : i32, i32
  }
  func.func @transform_5(%arg0: i32, %arg1: i32) -> (i32, i32) {
    %c0_i32 = arith.constant 0 : i32
    %c0_i32_0 = arith.constant 0 : i32
    return %arg1, %c0_i32 : i32, i32
  }
  func.func @transform_6(%arg0: i32, %arg1: i32) -> (i32, i32) {
    %c0_i32 = arith.constant 0 : i32
    %c0_i32_0 = arith.constant 0 : i32
    %c0_i32_1 = arith.constant 0 : i32
    return %c0_i32, %c0_i32_0 : i32, i32
  }
  func.func @transform_7(%arg0: i32, %arg1: i32) -> (i32, i32) {
    %c0_i32 = arith.constant 0 : i32
    %c0_i32_0 = arith.constant 0 : i32
    return %arg0, %c0_i32 : i32, i32
  }
}

</mosaic_0001>

<llo_original>
// kernel: tpu_custom_call.1
$region0: #{tpu_custom_call.1}
  #allocation0 [shape = 'u32[]', space=smem, size = 0x4, offset = 0x4, fixed_abs, tag = 'smem constant byte address 0x4 - core index']
  #allocation1 [shape = 'u32[72,128]{1,0:T(1,128)}', space=vmem, size = 0x9000, scoped, tag = 'internal scratch']
  #allocation2 [shape = 'f32[16,32]{1,0:T(8,128)}', space=vmem, size = 0x2000, scoped, tag = 'scratch operand']
  %s0 = inlined_call_operand.vmem [shape: f32[16,32], index: 0, kind: input, shape index: {}]
  %s1 = inlined_call_operand.vmem [shape: f32[32,64], index: 1, kind: input, shape index: {}]
  %s2 = inlined_call_operand.vmem [shape: f32[1,64], index: 2, kind: input, shape index: {}]
  %s3 = inlined_call_operand.vmem [shape: f32[32,64], index: 3, kind: input, shape index: {}]
  %s4 = inlined_call_operand.vmem [shape: f32[1,64], index: 4, kind: input, shape index: {}]
  %s5 = inlined_call_operand.vmem [shape: f32[64,32], index: 5, kind: input, shape index: {}]
  %s6 = inlined_call_operand.vmem [shape: f32[1,32], index: 6, kind: input, shape index: {}]
  %s7 = inlined_call_operand.hbm [shape: f32[16,32], index: 7, kind: output, shape index: {}]
  %s8 = sld [smem:[#allocation0]]
  $region46: #{tpu_custom_call.1} parent=0
    _
  %s10 = ssub.s32 1, %s8
  %s11 = scalar_select 0, %s10, %s8
  $region1: #{tpu_custom_call.1} parent=0
    #allocation3 [shape = 'u8[8192]{0}', space=vmem, size = 0x2000, scoped, tag = 'output window, operand 0, single buffered']
    #allocation4 [shape = 's32[1]{0}', space=sflag, size = 0x4, scoped, tag = 'scoped memory for tpu_custom_call.1']
    %12 = vsyncpa [#allocation4], 0
    // Predicated region
    $region2: #{tpu_custom_call.1} parent=1 // pred_check
      _
    $region3: #{tpu_custom_call.1} parent=1 // pred_check_branch
      %14 = sbr.rel (0) target = $region5
    $region4: #{tpu_custom_call.1} parent=1 // pred_region
      _
    $region5: #{tpu_custom_call.1} parent=1 // pred_fallthru
      _
    // Predicated region
    $region6: #{tpu_custom_call.1} parent=1 // pred_check
      _
    $region7: #{tpu_custom_call.1} parent=1 // pred_check_branch
      %16 = sbr.rel (0) target = $region9
    $region8: #{tpu_custom_call.1} parent=1 // pred_region
      _
    $region9: #{tpu_custom_call.1} parent=1 // pred_fallthru
      _
    // Predicated region
    $region10: #{tpu_custom_call.1} parent=1 // pred_check
      _
    $region11: #{tpu_custom_call.1} parent=1 // pred_check_branch
      %18 = sbr.rel (0) target = $region13
    $region12: #{tpu_custom_call.1} parent=1 // pred_region
      _
    $region13: #{tpu_custom_call.1} parent=1 // pred_fallthru
      _
    // Predicated region
    $region14: #{tpu_custom_call.1} parent=1 // pred_check
      _
    $region15: #{tpu_custom_call.1} parent=1 // pred_check_branch
      %20 = sbr.rel (0) target = $region17
    $region16: #{tpu_custom_call.1} parent=1 // pred_region
      _
    $region17: #{tpu_custom_call.1} parent=1 // pred_fallthru
      _
    // Predicated region
    $region18: #{tpu_custom_call.1} parent=1 // pred_check
      _
    $region19: #{tpu_custom_call.1} parent=1 // pred_check_branch
      %22 = sbr.rel (0) target = $region21
    $region20: #{tpu_custom_call.1} parent=1 // pred_region
      _
    $region21: #{tpu_custom_call.1} parent=1 // pred_fallthru
      _
    // Predicated region
    $region22: #{tpu_custom_call.1} parent=1 // pred_check
      _
    $region23: #{tpu_custom_call.1} parent=1 // pred_check_branch
      %24 = sbr.rel (0) target = $region25
    $region24: #{tpu_custom_call.1} parent=1 // pred_region
      _
    $region25: #{tpu_custom_call.1} parent=1 // pred_fallthru
      _
    // Predicated region
    $region26: #{tpu_custom_call.1} parent=1 // pred_check
      _
    $region27: #{tpu_custom_call.1} parent=1 // pred_check_branch
      %26 = sbr.rel (0) target = $region29
    $region28: #{tpu_custom_call.1} parent=1 // pred_region
      _
    $region29: #{tpu_custom_call.1} parent=1 // pred_fallthru
      _
    %p27 = scmp.eq.s32.totalorder 0, 0
    // Predicated region
    $region30: #{tpu_custom_call.1} parent=1 // pred_check
      %p28 = pneg %p27
    $region31: #{tpu_custom_call.1} parent=1 // pred_check_branch
      %30 = sbr.rel (%p28) target = $region33
    $region32: #{tpu_custom_call.1} parent=1 // pred_region
      %vm31 = vcmask 261120
      %32 = vst.msk [vmem:[#allocation2] sm:$0xff] %vm31, 0.0
      %33 = vst.msk [vmem:[#allocation2 + $0x8] sm:$0xff] %vm31, 0.0
    $region33: #{tpu_custom_call.1} parent=1 // pred_fallthru
      _
    %v34 = vld [vmem:[%s0] sm:$0xff]
    %v35 = vld [vmem:[%s0 + $0x8] sm:$0xff]
    %v36 = vld [vmem:[%s1] sm:$0xff]
    %v37 = vld [vmem:[%s1 + $0x8] sm:$0xff]
    %v38 = vld [vmem:[%s1 + $0x10] sm:$0xff]
    %v39 = vld [vmem:[%s1 + $0x18] sm:$0xff]
    %v40 = vld [vmem:[%s2] sm:$0x1]
    %v42 = vperm.slane %v40, 0
    %vm44 = vcmask 261120
    %v46 = vsel %vm44, %v34, 0
    %v49 = vsel %vm44, %v35, 0
    %51 = vmatpush.msra.mxu0 0.0
    %52 = vmatpush.msra.mxu0 0.0
    %53 = vmatpush.msra.mxu0 0.0
    %54 = vmatpush.msra.mxu0 0.0
    %55 = vmatpush.msra.mxu0 0.0
    %56 = vmatpush.msra.mxu0 0.0
    %57 = vmatpush.msra.mxu0 0.0
    %58 = vmatpush.msra.mxu0 0.0
    %59 = vmatpush.msra.mxu0 0.0
    %60 = vmatpush.msra.mxu0 0.0
    %61 = vmatpush.msra.mxu0 0.0
    %62 = vmatpush.msra.mxu0 0.0
    %63 = vmatpush.msra.mxu0 %v39
    %64 = vmatpush.msra.mxu0 %v38
    %65 = vmatpush.msra.mxu0 %v37
    %66 = vmatpush.msra.mxu0 %v36
    %67 = vmatmul.f32.gmra.mxu0 %v46
    %v68 = vpop.f32.mrf.mxu0
    %v69 = vadd.f32 %v42, %v68
    %70 = vmatmul.f32.gmra.mxu0 %v49
    %v71 = vpop.f32.mrf.mxu0
    %v72 = vadd.f32 %v42, %v71
    %73 = vdwg.mxu0
    %v74 = vld [vmem:[%s3] sm:$0xff]
    %v75 = vld [vmem:[%s3 + $0x8] sm:$0xff]
    %v76 = vld [vmem:[%s3 + $0x10] sm:$0xff]
    %v77 = vld [vmem:[%s3 + $0x18] sm:$0xff]
    %v78 = vld [vmem:[%s4] sm:$0x1]
    %v80 = vperm.slane %v78, 0
    %82 = vmatpush.msra.mxu0 0.0
    %83 = vmatpush.msra.mxu0 0.0
    %84 = vmatpush.msra.mxu0 0.0
    %85 = vmatpush.msra.mxu0 0.0
    %86 = vmatpush.msra.mxu0 0.0
    %87 = vmatpush.msra.mxu0 0.0
    %88 = vmatpush.msra.mxu0 0.0
    %89 = vmatpush.msra.mxu0 0.0
    %90 = vmatpush.msra.mxu0 0.0
    %91 = vmatpush.msra.mxu0 0.0
    %92 = vmatpush.msra.mxu0 0.0
    %93 = vmatpush.msra.mxu0 0.0
    %94 = vmatpush.msra.mxu0 %v77
    %95 = vmatpush.msra.mxu0 %v76
    %96 = vmatpush.msra.mxu0 %v75
    %97 = vmatpush.msra.mxu0 %v74
    %98 = vmatmul.f32.gmra.mxu0 %v46
    %v99 = vpop.f32.mrf.mxu0
    %v100 = vadd.f32 %v80, %v99
    %101 = vmatmul.f32.gmra.mxu0 %v49
    %v102 = vpop.f32.mrf.mxu0
    %v103 = vadd.f32 %v80, %v102
    %104 = vdwg.mxu0
    %v105 = vxor.u32 %v69, 2147483648
    %v106 = vxor.u32 %v72, 2147483648
    %v107 = vmul.f32 %v105, 1.442695
    %v108 = vpow.pop %v107
    %v109 = vmul.f32 %v106, 1.442695
    %v110 = vpow.pop %v109
    %v111 = vadd.f32 %v108, 1.0
    %v112 = vadd.f32 %v110, 1.0
    %v113 = vrcp.pop %v111
    %v114 = vmul.f32 %v111, %v113
    %v115 = vsub.f32 1.0, %v114
    %v116 = vmul.f32 %v113, %v115
    %v117 = vadd.f32 %v113, %v116
    %vm118 = vweird.f32 %v111
    %vm119 = vweird.f32 %v113
    %vm120 = vmor %vm118, %vm119
    %v121 = vsel %vm120, %v113, %v117
    %v122 = vand.u32 2147483647, %v111
    %vm123 = vcmp.eq.f32.partialorder %v122, 8.507059e+37
    %v124 = vand.u32 %v111, 2147483648
    %v125 = vor.u32 1.1754944e-38, %v124
    %v126 = vsel %vm123, %v125, %v121
    %v127 = vmul.f32 1.0, %v126
    %v128 = vrcp.pop %v112
    %v129 = vmul.f32 %v112, %v128
    %v130 = vsub.f32 1.0, %v129
    %v131 = vmul.f32 %v128, %v130
    %v132 = vadd.f32 %v128, %v131
    %vm133 = vweird.f32 %v112
    %vm134 = vweird.f32 %v128
    %vm135 = vmor %vm133, %vm134
    %v136 = vsel %vm135, %v128, %v132
    %v137 = vand.u32 2147483647, %v112
    %vm138 = vcmp.eq.f32.partialorder %v137, 8.507059e+37
    %v139 = vand.u32 %v112, 2147483648
    %v140 = vor.u32 1.1754944e-38, %v139
    %v141 = vsel %vm138, %v140, %v136
    %v142 = vmul.f32 1.0, %v141
    %v143 = vmul.f32 %v69, %v127
    %v144 = vmul.f32 %v72, %v142
    %v145 = vmul.f32 %v143, %v100
    %v146 = vmul.f32 %v144, %v103
    %v147 = vld [vmem:[#allocation2] sm:$0xff]
    %v148 = vld [vmem:[#allocation2 + $0x8] sm:$0xff]
    %v149 = vld [vmem:[%s5] sm:$0xff]
    %v150 = vld [vmem:[%s5 + $0x8] sm:$0xff]
    %v151 = vld [vmem:[%s5 + $0x10] sm:$0xff]
    %v152 = vld [vmem:[%s5 + $0x18] sm:$0xff]
    %v153 = vld [vmem:[%s5 + $0x20] sm:$0xff]
    %v154 = vld [vmem:[%s5 + $0x28] sm:$0xff]
    %v155 = vld [vmem:[%s5 + $0x30] sm:$0xff]
    %v156 = vld [vmem:[%s5 + $0x38] sm:$0xff]
    %vm157 = vcmask 523264
    %v159 = vsel %vm157, %v145, 0
    %v162 = vsel %vm157, %v146, 0
    %164 = vmatpush.msra.mxu0 0.0
    %165 = vmatpush.msra.mxu0 0.0
    %166 = vmatpush.msra.mxu0 0.0
    %167 = vmatpush.msra.mxu0 0.0
    %168 = vmatpush.msra.mxu0 0.0
    %169 = vmatpush.msra.mxu0 0.0
    %170 = vmatpush.msra.mxu0 0.0
    %171 = vmatpush.msra.mxu0 0.0
    %172 = vmatpush.msra.mxu0 %v156
    %173 = vmatpush.msra.mxu0 %v155
    %174 = vmatpush.msra.mxu0 %v154
    %175 = vmatpush.msra.mxu0 %v153
    %176 = vmatpush.msra.mxu0 %v152
    %177 = vmatpush.msra.mxu0 %v151
    %178 = vmatpush.msra.mxu0 %v150
    %179 = vmatpush.msra.mxu0 %v149
    %180 = vmatmul.f32.gmra.mxu0 %v159
    %v181 = vpop.f32.mrf.mxu0
    %v182 = vadd.f32 0.0, %v181
    %183 = vmatmul.f32.gmra.mxu0 %v162
    %v184 = vpop.f32.mrf.mxu0
    %v185 = vadd.f32 0.0, %v184
    %186 = vdwg.mxu0
    %v187 = vadd.f32 %v147, %v182
    %v188 = vadd.f32 %v148, %v185
    %189 = vst.msk [vmem:[#allocation2] sm:$0xff] %vm44, %v187
    %190 = vst.msk [vmem:[#allocation2 + $0x8] sm:$0xff] %vm44, %v188
    // Predicated region
    $region34: #{tpu_custom_call.1} parent=1 // pred_check
      %p191 = pneg %p27
    $region35: #{tpu_custom_call.1} parent=1 // pred_check_branch
      %193 = sbr.rel (%p191) target = $region37
    $region36: #{tpu_custom_call.1} parent=1 // pred_region
      %v194 = vld [vmem:[#allocation2] sm:$0xff]
      %v195 = vld [vmem:[#allocation2 + $0x8] sm:$0xff]
      %v196 = vld [vmem:[%s6] sm:$0x1]
      %v198 = vperm.slane %v196, 0
      %v200 = vadd.f32 %v194, %v198
      %v201 = vadd.f32 %v195, %v198
      %202 = vst.msk [vmem:[#allocation3] sm:$0xff] %vm44, %v200
      %203 = vst.msk [vmem:[#allocation3 + $0x8] sm:$0xff] %vm44, %v201
    $region37: #{tpu_custom_call.1} parent=1 // pred_fallthru
      _
    // Predicated region
    $region38: #{tpu_custom_call.1} parent=1 // pred_check
      _
    $region39: #{tpu_custom_call.1} parent=1 // pred_check_branch
      %205 = sbr.rel (0) target = $region41
    $region40: #{tpu_custom_call.1} parent=1 // pred_region
      %207 = vsyncadd [#allocation4], 0
      %s208 = sshll.u32 [#allocation3], 4
      %s209 = int_to_ptr.vmem [resolvable:$true] %s208
      %s210 = sshll.u32 %s7, 4
      %s211 = int_to_ptr.hbm [resolvable:$true] %s210
      %216 = dma.vmem_to_hbm [thread:$0]  %s209, 256, %s211, [#allocation4], 128, 128, 8
    $region41: #{tpu_custom_call.1} parent=1 // pred_fallthru
      _
    // Predicated region
    $region42: #{tpu_custom_call.1} parent=1 // pred_check
      _
    $region43: #{tpu_custom_call.1} parent=1 // pred_check_branch
      %218 = sbr.rel (0) target = $region45
    $region44: #{tpu_custom_call.1} parent=1 // pred_region
      %220 = dma.done [#allocation4], 256
    $region45: #{tpu_custom_call.1} parent=1 // pred_fallthru
      _
    %221 = vsyncpa [#allocation4], 1

</llo_original>
